<compile_context>
chip_gen: v7x
topology: tpu7x:2x2x1
jax: 0.10.0
libtpu: 0.0.40
codegen_flags: <defaults>
</compile_context>

<pallas_src>
import jax
import jax.numpy as jnp
from jax.experimental import pallas as pl
from jax.experimental.pallas import tpu as pltpu

H_NEURONS = 128


def critic_kernel(x_ref, w1_ref, b1_ref, w2_ref, b2_ref, out_ref):
    # x_ref:  (bm, S)        w1_ref: (S, 128)      b1_ref: (1, 128)
    # w2_ref: (1, 128)       b2_ref: (1,) in SMEM  out_ref: (1, bm)
    h = jnp.dot(x_ref[...], w1_ref[...],
                preferred_element_type=jnp.float32)           # MXU
    h = jnp.maximum(h + b1_ref[...], 0.0)                     # bias + ReLU (VPU)
    # Head (128 -> 1): VPU multiply + XLU lane reduce; result lands lane-dense.
    v = jnp.sum(h * w2_ref[...], axis=-1) + b2_ref[0]         # (bm,)
    out_ref[...] = v.reshape(1, -1).astype(out_ref.dtype)     # lane-dense store


def critic_forward(x, w1, b1, w2, b2):
    """x: (B, S) or (S,); w1: (S, 128); b1: (1, 128); w2: (1, 128); b2: (1,).

    Returns the critic value with shape (B, 1), float32.
    """
    squeeze_batch = False
    if x.ndim == 1:                     # single state, like nn.Linear allows
        x = x[None, :]
        squeeze_batch = True

    B, S = x.shape
    if B <= 1024:
        bm = B                          # single fat grid step — whole batch
    else:
        bm = 512                        # multiple of (8, 128)-friendly tiling
    Bp = pl.cdiv(B, bm) * bm
    if Bp != B:
        x = jnp.pad(x, ((0, Bp - B), (0, 0)))
    grid = (Bp // bm,)

    out = pl.pallas_call(
        critic_kernel,
        out_shape=jax.ShapeDtypeStruct((1, Bp), jnp.float32),   # lane-dense values
        grid_spec=pltpu.PrefetchScalarGridSpec(
            num_scalar_prefetch=0,
            grid=grid,
            in_specs=[
                pl.BlockSpec((bm, S), lambda i: (i, 0)),             # x tile
                pl.BlockSpec((S, H_NEURONS), lambda i: (0, 0)),      # W1 (full, resident)
                pl.BlockSpec((1, H_NEURONS), lambda i: (0, 0)),      # b1
                pl.BlockSpec((1, H_NEURONS), lambda i: (0, 0)),      # W2 row
                pl.BlockSpec(memory_space=pltpu.MemorySpace.SMEM),   # b2 scalar
            ],
            out_specs=pl.BlockSpec((1, bm), lambda i: (0, i)),
        ),
        compiler_params=pltpu.CompilerParams(
            dimension_semantics=("parallel",)),   # shards batch tiles across TCs (v7x)
    )(x, w1, b1, w2, b2)

    # Free layout plumbing back to the PyTorch (B, 1) shape.
    value = out[0, :B].reshape(B, 1)
    if squeeze_batch:
        value = value[0]
    return value


def init_critic_params(key, state_size):
    """Deterministic init mimicking nn.Linear default (uniform +-1/sqrt(fan_in))."""
    k1, k2, k3, k4 = jax.random.split(key, 4)
    lim1 = 1.0 / float(state_size) ** 0.5
    lim2 = 1.0 / float(H_NEURONS) ** 0.5
    # fc1 weight stored as [in, out] (PyTorch weight transposed)
    w1 = jax.random.uniform(k1, (state_size, H_NEURONS), jnp.float32, -lim1, lim1)
    b1 = jax.random.uniform(k2, (1, H_NEURONS), jnp.float32, -lim1, lim1)
    # head weight kept in PyTorch (out, in) = (1, 128) layout
    w2 = jax.random.uniform(k3, (1, H_NEURONS), jnp.float32, -lim2, lim2)
    b2 = jax.random.uniform(k4, (1,), jnp.float32, -lim2, lim2)
    return w1, b1, w2, b2


if __name__ == "__main__":
    key = jax.random.PRNGKey(0)
    k_x, k_p = jax.random.split(key)

    batch, state_size = 16, 32
    x = jax.random.normal(k_x, (batch, state_size), jnp.float32)
    w1, b1, w2, b2 = init_critic_params(k_p, state_size)

    value = critic_forward(x, w1, b1, w2, b2)
    jax.block_until_ready(value)

    # Pure-JAX reference check
    ref = jnp.maximum(x @ w1 + b1, 0.0) @ w2.T + b2
    assert value.shape == (batch, 1)
    assert jnp.allclose(value, ref, atol=1e-5, rtol=1e-5)

    print("KERNEL_OK")
</pallas_src>

<mosaic_0001>
module attributes {stable_mosaic.version = 11 : i64} {
  func.func @critic_kernel(%arg0: i32, %arg1: memref<16x32xf32, #tpu.memory_space<vmem>>, %arg2: memref<32x128xf32, #tpu.memory_space<vmem>>, %arg3: memref<1x128xf32, #tpu.memory_space<vmem>>, %arg4: memref<1x128xf32, #tpu.memory_space<vmem>>, %arg5: memref<1xf32, #tpu.memory_space<smem>>, %arg6: memref<1x16xf32, #tpu.memory_space<vmem>>) attributes {dimension_semantics = [#tpu.dimension_semantics<parallel>], iteration_bounds = array<i64: 1>, scalar_prefetch = 0 : i64, scratch_operands = 0 : i64, tpu.core_type = #tpu.core_type<tc>, window_params = [{transform_indices = @transform_0, window_bounds = array<i64: 16, 32>}, {pipeline_mode = #tpu.pipeline_mode<synchronous>, transform_indices = @transform_1, window_bounds = array<i64: 32, 128>}, {pipeline_mode = #tpu.pipeline_mode<synchronous>, transform_indices = @transform_2, window_bounds = array<i64: 1, 128>}, {pipeline_mode = #tpu.pipeline_mode<synchronous>, transform_indices = @transform_3, window_bounds = array<i64: 1, 128>}, {transform_indices = @transform_4, window_bounds = array<i64: 1>}, {transform_indices = @transform_5, window_bounds = array<i64: 1, 16>}]} {
    %c0 = arith.constant 0 : index
    %c0_0 = arith.constant 0 : index
    %0 = vector.load %arg1[%c0, %c0_0] : memref<16x32xf32, #tpu.memory_space<vmem>>, vector<16x32xf32>
    %c0_1 = arith.constant 0 : index
    %c0_2 = arith.constant 0 : index
    %1 = vector.load %arg2[%c0_1, %c0_2] : memref<32x128xf32, #tpu.memory_space<vmem>>, vector<32x128xf32>
    %cst = arith.constant dense<0.000000e+00> : vector<16x128xf32>
    %2 = tpu.matmul %0, %1, %cst {dimension_numbers = #tpu.dot_dimension_numbers<[1], [0], [0], [1], [0, 0, 1, 1], [], []>} : vector<16x32xf32>, vector<32x128xf32>, vector<16x128xf32> -> vector<16x128xf32>
    %c0_3 = arith.constant 0 : index
    %c0_4 = arith.constant 0 : index
    %3 = vector.load %arg3[%c0_3, %c0_4] : memref<1x128xf32, #tpu.memory_space<vmem>>, vector<1x128xf32>
    %4 = vector.broadcast %3 : vector<1x128xf32> to vector<16x128xf32>
    %5 = arith.addf %2, %4 : vector<16x128xf32>
    %cst_5 = arith.constant 0.000000e+00 : f32
    %6 = vector.broadcast %cst_5 : f32 to vector<16x128xf32>
    %7 = arith.maximumf %5, %6 : vector<16x128xf32>
    %c0_6 = arith.constant 0 : index
    %c0_7 = arith.constant 0 : index
    %8 = vector.load %arg4[%c0_6, %c0_7] : memref<1x128xf32, #tpu.memory_space<vmem>>, vector<1x128xf32>
    %9 = vector.broadcast %8 : vector<1x128xf32> to vector<16x128xf32>
    %10 = arith.mulf %7, %9 : vector<16x128xf32>
    %cst_8 = arith.constant dense<0.000000e+00> : vector<16xf32>
    %11 = vector.multi_reduction <add>, %10, %cst_8 [1] : vector<16x128xf32> to vector<16xf32>
    %c0_9 = arith.constant 0 : index
    %12 = memref.load %arg5[%c0_9] : memref<1xf32, #tpu.memory_space<smem>>
    %13 = vector.broadcast %12 : f32 to vector<16xf32>
    %14 = arith.addf %11, %13 : vector<16xf32>
    %15 = vector.shape_cast %14 : vector<16xf32> to vector<1x16xf32>
    %c0_10 = arith.constant 0 : index
    %c0_11 = arith.constant 0 : index
    %16 = vector.load %arg6[%c0_10, %c0_11] : memref<1x16xf32, #tpu.memory_space<vmem>>, vector<1x16xf32>
    tpu.vector_store %arg6[%c0_10, %c0_11], %15 {strides = array<i32>} : memref<1x16xf32, #tpu.memory_space<vmem>>, vector<1x16xf32>,
    return
  }
  func.func @transform_0(%arg0: i32) -> (i32, i32) {
    %c0_i32 = arith.constant 0 : i32
    %c0_i32_0 = arith.constant 0 : i32
    return %arg0, %c0_i32 : i32, i32
  }
  func.func @transform_1(%arg0: i32) -> (i32, i32) {
    %c0_i32 = arith.constant 0 : i32
    %c0_i32_0 = arith.constant 0 : i32
    %c0_i32_1 = arith.constant 0 : i32
    return %c0_i32, %c0_i32_0 : i32, i32
  }
  func.func @transform_2(%arg0: i32) -> (i32, i32) {
    %c0_i32 = arith.constant 0 : i32
    %c0_i32_0 = arith.constant 0 : i32
    %c0_i32_1 = arith.constant 0 : i32
    return %c0_i32, %c0_i32_0 : i32, i32
  }
  func.func @transform_3(%arg0: i32) -> (i32, i32) {
    %c0_i32 = arith.constant 0 : i32
    %c0_i32_0 = arith.constant 0 : i32
    %c0_i32_1 = arith.constant 0 : i32
    return %c0_i32, %c0_i32_0 : i32, i32
  }
  func.func @transform_4(%arg0: i32) -> i32 {
    %c0_i32 = arith.constant 0 : i32
    %c0_i32_0 = arith.constant 0 : i32
    return %c0_i32 : i32
  }
  func.func @transform_5(%arg0: i32) -> (i32, i32) {
    %c0_i32 = arith.constant 0 : i32
    %c0_i32_0 = arith.constant 0 : i32
    return %c0_i32, %arg0 : i32, i32
  }
}

</mosaic_0001>

<llo_original>
// kernel: tpu_custom_call.1
$region0: #{tpu_custom_call.1}
  #allocation0 [shape = 'u32[]', space=smem, size = 0x4, offset = 0x4, fixed_abs, tag = 'smem constant byte address 0x4 - core index']
  #allocation1 [shape = 'u32[144,128]{1,0:T(1,128)}', space=vmem, size = 0x12000, scoped, tag = 'internal scratch']
  #allocation2 [shape = 'f32[1]{0:T(128)S(6)}', space=smem, size = 0x200, scoped, tag = 'scoped memory for tpu_custom_call.1']
  %s0 = inlined_call_operand.hbm [shape: f32[16,32], index: 0, kind: input, shape index: {}]
  %s1 = inlined_call_operand.hbm [shape: f32[32,128], index: 1, kind: input, shape index: {}]
  %s2 = inlined_call_operand.vmem [shape: f32[1,128], index: 2, kind: input, shape index: {}]
  %s3 = inlined_call_operand.vmem [shape: f32[1,128], index: 3, kind: input, shape index: {}]
  %s4 = inlined_call_operand.<no memory space> [shape: f32[1], index: 4, kind: input, shape index: {}]
  %s5 = inlined_call_operand.hbm [shape: f32[1,16], index: 5, kind: output, shape index: {}]
  %s6 = sld [smem:[#allocation0]]
  $region38: #{tpu_custom_call.1} parent=0
    _
  %s8 = ssub.s32 1, %s6
  %s9 = scalar_select 0, %s8, %s6
  %10 = sst [smem:[#allocation2]] %s4
  $region1: #{tpu_custom_call.1} parent=0
    #allocation3 [shape = 'u8[8192]{0}', space=vmem, size = 0x2000, scoped, tag = 'input window, operand 0, single buffered']
    #allocation4 [shape = 's32[1]{0}', space=sflag, size = 0x4, scoped, tag = 'scoped memory for tpu_custom_call.1']
    #allocation5 [shape = 's32[1]{0}', space=sflag, size = 0x4, scoped, tag = 'scoped memory for tpu_custom_call.1']
    #allocation6 [shape = 'u8[16384]{0}', space=vmem, size = 0x4000, scoped, tag = 'input window, operand 1, single buffered']
    #allocation7 [shape = 's32[1]{0}', space=sflag, size = 0x4, scoped, tag = 'scoped memory for tpu_custom_call.1']
    #allocation8 [shape = 'u8[512]{0}', space=vmem, size = 0x400, scoped, tag = 'output window, operand 0, single buffered']
    %11 = vsyncpa [#allocation4], 0
    %12 = vsyncpa [#allocation7], 0
    %13 = vsyncpa [#allocation5], 0
    // Predicated region
    $region2: #{tpu_custom_call.1} parent=1 // pred_check
      _
    $region3: #{tpu_custom_call.1} parent=1 // pred_check_branch
      %15 = sbr.rel (0) target = $region5
    $region4: #{tpu_custom_call.1} parent=1 // pred_region
      %s17 = ssub.s32 256, 256
      %18 = vsyncadd [#allocation4], %s17
      %s19 = sshll.u32 [#allocation3], 4
      %s20 = int_to_ptr.vmem [resolvable:$true] %s19
      %25 = dma.hbm_to_vmem [thread:$0]  %s0, 256, %s20, [#allocation4], 128, 128, 8
    $region5: #{tpu_custom_call.1} parent=1 // pred_fallthru
      _
    // Predicated region
    $region6: #{tpu_custom_call.1} parent=1 // pred_check
      _
    $region7: #{tpu_custom_call.1} parent=1 // pred_check_branch
      %27 = sbr.rel (0) target = $region9
    $region8: #{tpu_custom_call.1} parent=1 // pred_region
      %s29 = ssub.s32 512, 512
      %30 = vsyncadd [#allocation7], %s29
      %s31 = sshll.u32 [#allocation6], 4
      %s32 = int_to_ptr.vmem [resolvable:$true] %s31
      %37 = dma.hbm_to_vmem [thread:$0]  %s1, 512, %s32, [#allocation7], 128, 128, 8
    $region9: #{tpu_custom_call.1} parent=1 // pred_fallthru
      _
    // Predicated region
    $region10: #{tpu_custom_call.1} parent=1 // pred_check
      _
    $region11: #{tpu_custom_call.1} parent=1 // pred_check_branch
      %39 = sbr.rel (0) target = $region13
    $region12: #{tpu_custom_call.1} parent=1 // pred_region
      _
    $region13: #{tpu_custom_call.1} parent=1 // pred_fallthru
      _
    // Predicated region
    $region14: #{tpu_custom_call.1} parent=1 // pred_check
      _
    $region15: #{tpu_custom_call.1} parent=1 // pred_check_branch
      %41 = sbr.rel (0) target = $region17
    $region16: #{tpu_custom_call.1} parent=1 // pred_region
      _
    $region17: #{tpu_custom_call.1} parent=1 // pred_fallthru
      _
    // Predicated region
    $region18: #{tpu_custom_call.1} parent=1 // pred_check
      _
    $region19: #{tpu_custom_call.1} parent=1 // pred_check_branch
      %43 = sbr.rel (0) target = $region21
    $region20: #{tpu_custom_call.1} parent=1 // pred_region
      _
    $region21: #{tpu_custom_call.1} parent=1 // pred_fallthru
      _
    // Predicated region
    $region22: #{tpu_custom_call.1} parent=1 // pred_check
      _
    $region23: #{tpu_custom_call.1} parent=1 // pred_check_branch
      %45 = sbr.rel (0) target = $region25
    $region24: #{tpu_custom_call.1} parent=1 // pred_region
      %46 = dma.done [#allocation4], 256
    $region25: #{tpu_custom_call.1} parent=1 // pred_fallthru
      _
    // Predicated region
    $region26: #{tpu_custom_call.1} parent=1 // pred_check
      _
    $region27: #{tpu_custom_call.1} parent=1 // pred_check_branch
      %48 = sbr.rel (0) target = $region29
    $region28: #{tpu_custom_call.1} parent=1 // pred_region
      %49 = dma.done [#allocation7], 512
    $region29: #{tpu_custom_call.1} parent=1 // pred_fallthru
      _
    %v50 = vld [vmem:[#allocation3] sm:$0xff]
    %v51 = vld [vmem:[#allocation3 + $0x8] sm:$0xff]
    %v52 = vld [vmem:[#allocation6] sm:$0xff]
    %v53 = vld [vmem:[#allocation6 + $0x8] sm:$0xff]
    %v54 = vld [vmem:[#allocation6 + $0x10] sm:$0xff]
    %v55 = vld [vmem:[#allocation6 + $0x18] sm:$0xff]
    %v56 = vld [vmem:[%s2] sm:$0x1]
    %v58 = vlaneseq
    %v59 = vshrl.u32 %v58, 7
    %v60 = vsub.s32 0, %v59
    %v61 = vrot.slane %v56, %v60
    %vm63 = vcmask 261120
    %v65 = vsel %vm63, %v50, 0
    %v68 = vsel %vm63, %v51, 0
    %70 = vmatprep.subr.mxu0 0.0
    %71 = vmatpush1.msra.mxu0 %v52
    %72 = vmatprep.subr.mxu0 0.0
    %73 = vmatpush1.msra.mxu0 %v53
    %74 = vmatprep.subr.mxu0 0.0
    %75 = vmatpush1.msra.mxu0 %v54
    %76 = vmatprep.subr.mxu0 0.0
    %77 = vmatpush1.msra.mxu0 %v55
    %78 = vmatprep.subr.mxu0 0.0
    %79 = vmatpush1.msra.mxu0 0.0
    %80 = vmatprep.subr.mxu0 0.0
    %81 = vmatpush1.msra.mxu0 0.0
    %82 = vmatprep.subr.mxu0 0.0
    %83 = vmatpush1.msra.mxu0 0.0
    %84 = vmatprep.subr.mxu0 0.0
    %85 = vmatpush1.msra.mxu0 0.0
    %86 = vmatprep.subr.mxu0 0.0
    %87 = vmatpush1.msra.mxu0 0.0
    %88 = vmatprep.subr.mxu0 0.0
    %89 = vmatpush1.msra.mxu0 0.0
    %90 = vmatprep.subr.mxu0 0.0
    %91 = vmatpush1.msra.mxu0 0.0
    %92 = vmatprep.subr.mxu0 0.0
    %93 = vmatpush1.msra.mxu0 0.0
    %94 = vmatprep.subr.mxu0 0.0
    %95 = vmatpush1.msra.mxu0 0.0
    %96 = vmatprep.subr.mxu0 0.0
    %97 = vmatpush1.msra.mxu0 0.0
    %98 = vmatprep.subr.mxu0 0.0
    %99 = vmatpush1.msra.mxu0 0.0
    %100 = vmatprep.subr.mxu0 0.0
    %101 = vmatpush1.msra.mxu0 0.0
    %102 = vmatprep.subr.mxu0 0.0
    %103 = vmatpush1.msra.mxu0 0.0
    %104 = vmatprep.subr.mxu0 0.0
    %105 = vmatpush1.msra.mxu0 0.0
    %106 = vmatprep.subr.mxu0 0.0
    %107 = vmatpush1.msra.mxu0 0.0
    %108 = vmatprep.subr.mxu0 0.0
    %109 = vmatpush1.msra.mxu0 0.0
    %110 = vmatprep.subr.mxu0 0.0
    %111 = vmatpush1.msra.mxu0 0.0
    %112 = vmatprep.subr.mxu0 0.0
    %113 = vmatpush1.msra.mxu0 0.0
    %114 = vmatprep.subr.mxu0 0.0
    %115 = vmatpush1.msra.mxu0 0.0
    %116 = vmatprep.subr.mxu0 0.0
    %117 = vmatpush1.msra.mxu0 0.0
    %118 = vmatprep.subr.mxu0 0.0
    %119 = vmatpush1.msra.mxu0 0.0
    %120 = vmatprep.subr.mxu0 0.0
    %121 = vmatpush1.msra.mxu0 0.0
    %122 = vmatprep.subr.mxu0 0.0
    %123 = vmatpush1.msra.mxu0 0.0
    %124 = vmatprep.subr.mxu0 0.0
    %125 = vmatpush1.msra.mxu0 0.0
    %126 = vmatprep.subr.mxu0 0.0
    %127 = vmatpush1.msra.mxu0 0.0
    %128 = vmatprep.subr.mxu0 0.0
    %129 = vmatpush1.msra.mxu0 0.0
    %130 = vmatprep.subr.mxu0 0.0
    %131 = vmatpush1.msra.mxu0 0.0
    %132 = vmatprep.subr.mxu0 0.0
    %133 = vmatpush1.msra.mxu0 0.0
    %134 = vmatprep.mubr.f32.mxu0 0.0
    %135 = vmatmul.mubr.f32.gmra.mrb[0].mxu0 %v65
    %v136 = vpop.f32.mrb[0].mxu0
    %v137 = vadd.f32 %v61, %v136
    %v138 = vpop.f32.mrb[0].mxu0
    %139 = vmatprep.mubr.f32.mxu0 0.0
    %140 = vmatmul.mubr.f32.gmra.mrb[0].mxu0 %v68
    %v141 = vpop.f32.mrb[0].mxu0
    %v142 = vadd.f32 %v61, %v141
    %v143 = vpop.f32.mrb[0].mxu0
    %144 = vdwg.mxu0
    %v145 = vmax.f32 %v137, 0.0
    %v146 = vmax.f32 %v142, 0.0
    %v147 = vld [vmem:[%s3] sm:$0x1]
    %v149 = vlaneseq
    %v150 = vshrl.u32 %v149, 7
    %v151 = vsub.s32 0, %v150
    %v152 = vrot.slane %v147, %v151
    %v154 = vmul.f32 %v145, %v152
    %v155 = vmul.f32 %v146, %v152
    %156 = vadd.xlane.f32.xlu0 %v154
    %v157 = vpop.xlane.xlu0 %156
    %158 = vadd.xlane.f32.xlu0 %v155
    %v159 = vpop.xlane.xlu0 %158
    %s160 = sld [smem:[#allocation2]]
    %v161 = vstv %s160
    %v162 = vadd.f32 %v157, %v161
    %v163 = vadd.f32 %v159, %v161
    %v166 = vlaneseq
    %v167 = vand.u32 %v166, 127
    %v168 = vlaneseq
    %v169 = vshrl.u32 %v168, 7
    %v170 = vsub.s32 %v167, %v169
    %v171 = vrot.slane %v162, %v170
    %v172 = vadd.s32 %v167, 4294967288
    %v173 = vlaneseq
    %v174 = vshrl.u32 %v173, 7
    %v175 = vsub.s32 %v172, %v174
    %v176 = vrot.slane %v163, %v175
    %vm177 = vcmask 130112
    %v178 = vsel %vm177, %v176, %v171
    %vm180 = vcmask 122880
    %181 = vst.msk [vmem:[#allocation8] sm:$0x1] %vm180, %v178
    // Predicated region
    $region30: #{tpu_custom_call.1} parent=1 // pred_check
      _
    $region31: #{tpu_custom_call.1} parent=1 // pred_check_branch
      %183 = sbr.rel (0) target = $region33
    $region32: #{tpu_custom_call.1} parent=1 // pred_region
      %s185 = ssub.s32 16, 16
      %186 = vsyncadd [#allocation5], %s185
      %s188 = sshll.u32 [#allocation8], 4
      %s189 = int_to_ptr.vmem [resolvable:$true] %s188
      %191 = dma.vmem_to_hbm [thread:$0]  %s189, 16, %s5, [#allocation5]
    $region33: #{tpu_custom_call.1} parent=1 // pred_fallthru
      _
    // Predicated region
    $region34: #{tpu_custom_call.1} parent=1 // pred_check
      _
    $region35: #{tpu_custom_call.1} parent=1 // pred_check_branch
      %193 = sbr.rel (0) target = $region37
    $region36: #{tpu_custom_call.1} parent=1 // pred_region
      %194 = dma.done [#allocation5], 16
    $region37: #{tpu_custom_call.1} parent=1 // pred_fallthru
      _
    %195 = vsyncpa [#allocation4], 1
    %196 = vsyncpa [#allocation7], 1
    %197 = vsyncpa [#allocation5], 1

</llo_original>
